<compile_context>
chip_gen: v7x
topology: tpu7x:2x2x1
jax: 0.10.0
libtpu: 0.0.40
codegen_flags: <defaults>
</compile_context>

<pallas_src>
import functools

import jax
import jax.numpy as jnp
from jax.experimental import pallas as pl
from jax.experimental.pallas import tpu as pltpu


# Scoped-VMEM limit requested from Mosaic (<= default on v6e/v7x, an explicit
# raise over v5e's 16 MiB default) and the budget used when sizing Hd tiles
# (double-buffered in+out blocks must fit under it).
_VMEM_LIMIT_BYTES = 32 * 1024 * 1024
_BLOCK_BUDGET_BYTES = 24 * 1024 * 1024


def _make_squeeze_kernel(block_size, channels):
    bs = block_size
    cin = bs * channels                 # lane width of the input view
    lane_aligned = (cin % 128) == 0     # deep-layer case: aligned lane blocks

    def squeeze_kernel(x_ref, o_ref):
        # x_ref: (1, th, bs, Wd, bs*C)   (sublane = Wd, lane = bs*C)
        # o_ref: (1, th, Wd, bs*bs*C)    (sublane = Wd, lane = bs*bs*C)
        #
        # Pure data movement: for each intra-block row offset `ho`, the slab
        # x_view[:, :, ho, :, :] lands in the static lane range
        # [ho*bs*C, (ho+1)*bs*C) of every output row.
        if lane_aligned:
            # Static offsets are multiples of 128 -> aligned, unmasked
            # lane-block stores; zero relayout work.
            for ho in range(bs):
                o_ref[0, :, :, ho * cin:(ho + 1) * cin] = x_ref[0, :, ho, :, :]
        else:
            # Narrow-channel case: assemble the full output row in vregs and
            # issue a single dense store instead of bs masked partial stores.
            o_ref[0, :, :, :] = jnp.concatenate(
                [x_ref[0, :, ho, :, :] for ho in range(bs)], axis=-1)

    return squeeze_kernel


def _pick_h_tile(h_down, bytes_per_row):
    """Largest divisor of Hd whose double-buffered blocks fit the budget."""
    cap = max(1, _BLOCK_BUDGET_BYTES // max(1, bytes_per_row))
    cap = min(cap, h_down)
    for th in range(cap, 0, -1):
        if h_down % th == 0:
            return th
    return 1


def squeeze_forward(x, block_size):
    """Pallas equivalent of squeeze(block_size).forward(x), x in NCHW."""
    bs = block_size
    B, C, H, W = x.shape
    assert H % bs == 0 and W % bs == 0, "H and W must be divisible by block_size"
    Hd, Wd = H // bs, W // bs
    cin = bs * C            # input-view lane width
    cout = bs * bs * C      # output-view lane width (= d_depth)

    # NCHW -> NHWC glue (mirrors input.permute(0, 2, 3, 1) in the module),
    # then a free row-major reshape that (a) exposes the intra-block row
    # offset `ho` as its own dim and (b) merges (wo, c) into a single
    # lane-dense minor dim of width bs*C.
    x_view = jnp.transpose(x, (0, 2, 3, 1)).reshape(B, Hd, bs, Wd, cin)

    itemsize = jnp.dtype(x.dtype).itemsize
    # Per Hd-row bytes of (input block + output block), double-buffered by the
    # BlockSpec pipeline.
    bytes_per_row = 2 * 2 * Wd * cout * itemsize
    th = _pick_h_tile(Hd, bytes_per_row)

    out_view = pl.pallas_call(
        _make_squeeze_kernel(bs, C),
        out_shape=jax.ShapeDtypeStruct((B, Hd, Wd, cout), x.dtype),
        grid=(B, Hd // th),
        in_specs=[
            pl.BlockSpec((1, th, bs, Wd, cin), lambda b, h: (b, h, 0, 0, 0)),
        ],
        out_specs=pl.BlockSpec((1, th, Wd, cout), lambda b, h: (b, h, 0, 0)),
        compiler_params=pltpu.CompilerParams(
            dimension_semantics=("parallel", "parallel"),
            vmem_limit_bytes=_VMEM_LIMIT_BYTES),
    )(x_view)

    # Lane dim already equals d_depth, so no reshape is needed here; only the
    # NHWC -> NCHW glue remains (mirrors the module's final .permute(0,3,1,2)).
    return jnp.transpose(out_view, (0, 3, 1, 2))


def squeeze_reference(x, block_size):
    """Pure-JAX transcription of the PyTorch forward, for validation."""
    bs = block_size
    B, C, H, W = x.shape
    o = jnp.transpose(x, (0, 2, 3, 1))                    # (B, H, W, C)
    o = o.reshape(B, H // bs, bs, W // bs, bs, C)
    o = jnp.transpose(o, (0, 1, 3, 2, 4, 5))              # (B, Hd, Wd, ho, wo, C)
    o = o.reshape(B, H // bs, W // bs, bs * bs * C)
    return jnp.transpose(o, (0, 3, 1, 2))                 # (B, bs^2*C, Hd, Wd)


def _check(B, C, H, W, block_size, dtype, key):
    x = jax.random.normal(key, (B, C, H, W), dtype=dtype)
    fwd = jax.jit(functools.partial(squeeze_forward, block_size=block_size))
    y = jax.block_until_ready(fwd(x))
    y_ref = squeeze_reference(x, block_size)
    assert y.shape == (B, C * block_size * block_size,
                       H // block_size, W // block_size), y.shape
    assert y.dtype == x.dtype
    assert jnp.array_equal(y, y_ref), (
        f"Pallas squeeze mismatch vs reference for shape {(B, C, H, W)}")


if __name__ == "__main__":
    key = jax.random.PRNGKey(0)
    k0, k1 = jax.random.split(key)

    # Shallow-layer style shape (narrow C -> dense concatenate-store path), f32.
    _check(B=2, C=4, H=16, W=16, block_size=2, dtype=jnp.float32, key=k0)

    # Deep-layer style shape (bs*C a multiple of 128 -> aligned unmasked
    # lane-block store path), bf16 (second-minor dims stay full-extent).
    _check(B=1, C=128, H=8, W=8, block_size=2, dtype=jnp.bfloat16, key=k1)

    print("KERNEL_OK")
</pallas_src>

<mosaic_0001>
module attributes {stable_mosaic.version = 11 : i64} {
  func.func @squeeze_kernel(%arg0: i32, %arg1: i32, %arg2: memref<1x8x2x8x8xf32, #tpu.memory_space<vmem>>, %arg3: memref<1x8x8x16xf32, #tpu.memory_space<vmem>>) attributes {dimension_semantics = [#tpu.dimension_semantics<parallel>, #tpu.dimension_semantics<parallel>], iteration_bounds = array<i64: 2, 1>, scalar_prefetch = 0 : i64, scratch_operands = 0 : i64, tpu.core_type = #tpu.core_type<tc>, window_params = [{transform_indices = @transform_0, window_bounds = array<i64: 1, 8, 2, 8, 8>}, {transform_indices = @transform_1, window_bounds = array<i64: 1, 8, 8, 16>}]} {
    %c0 = arith.constant 0 : index
    %c0_0 = arith.constant 0 : index
    %c0_1 = arith.constant 0 : index
    %c0_2 = arith.constant 0 : index
    %c0_3 = arith.constant 0 : index
    %0 = vector.load %arg2[%c0, %c0_0, %c0_1, %c0_2, %c0_3] : memref<1x8x2x8x8xf32, #tpu.memory_space<vmem>>, vector<1x8x1x8x8xf32>
    %1 = vector.shape_cast %0 : vector<1x8x1x8x8xf32> to vector<8x8x8xf32>
    %c0_4 = arith.constant 0 : index
    %c0_5 = arith.constant 0 : index
    %c1 = arith.constant 1 : index
    %c0_6 = arith.constant 0 : index
    %c0_7 = arith.constant 0 : index
    %2 = vector.load %arg2[%c0_4, %c0_5, %c1, %c0_6, %c0_7] : memref<1x8x2x8x8xf32, #tpu.memory_space<vmem>>, vector<1x8x1x8x8xf32>
    %3 = vector.shape_cast %2 : vector<1x8x1x8x8xf32> to vector<8x8x8xf32>
    %4 = tpu.concatenate %1, %3 in 2 : vector<8x8x8xf32>, vector<8x8x8xf32> -> vector<8x8x16xf32>
    %c0_8 = arith.constant 0 : index
    %c0_9 = arith.constant 0 : index
    %c0_10 = arith.constant 0 : index
    %c0_11 = arith.constant 0 : index
    %5 = vector.load %arg3[%c0_8, %c0_9, %c0_10, %c0_11] : memref<1x8x8x16xf32, #tpu.memory_space<vmem>>, vector<1x8x8x16xf32>
    %6 = vector.shape_cast %5 : vector<1x8x8x16xf32> to vector<8x8x16xf32>
    %7 = vector.shape_cast %4 : vector<8x8x16xf32> to vector<1x8x8x16xf32>
    tpu.vector_store %arg3[%c0_8, %c0_9, %c0_10, %c0_11], %7 {strides = array<i32>} : memref<1x8x8x16xf32, #tpu.memory_space<vmem>>, vector<1x8x8x16xf32>,
    return
  }
  func.func @transform_0(%arg0: i32, %arg1: i32) -> (i32, i32, i32, i32, i32) {
    %c0_i32 = arith.constant 0 : i32
    %c0_i32_0 = arith.constant 0 : i32
    %c0_i32_1 = arith.constant 0 : i32
    %c0_i32_2 = arith.constant 0 : i32
    return %arg0, %arg1, %c0_i32, %c0_i32_0, %c0_i32_1 : i32, i32, i32, i32, i32
  }
  func.func @transform_1(%arg0: i32, %arg1: i32) -> (i32, i32, i32, i32) {
    %c0_i32 = arith.constant 0 : i32
    %c0_i32_0 = arith.constant 0 : i32
    %c0_i32_1 = arith.constant 0 : i32
    return %arg0, %arg1, %c0_i32, %c0_i32_0 : i32, i32, i32, i32
  }
}

</mosaic_0001>

<llo_original>
// kernel: squeeze_forward.1
$region0: #{squeeze_forward.1}
  #allocation0 [shape = 'u32[]', space=smem, size = 0x4, offset = 0x4, fixed_abs, tag = 'smem constant byte address 0x4 - core index']
  #allocation1 [shape = 'u32[144,128]{1,0:T(1,128)}', space=vmem, size = 0x12000, scoped, tag = 'internal scratch']
  %s0 = inlined_call_operand.vmem [shape: f32[2,8,2,8,8], index: 0, kind: input, shape index: {}]
  %s1 = inlined_call_operand.hbm [shape: f32[2,8,8,16], index: 1, kind: output, shape index: {}]
  %s2 = sld [smem:[#allocation0]]
  $region37: #{squeeze_forward.1} parent=0
    _
  %s4 = ssub.s32 1, %s2
  %s5 = scalar_select 0, %s4, %s2
  $region1: #{squeeze_forward.1} parent=0
    #allocation2 [shape = 'u8[65536]{0}', space=vmem, size = 0x10000, scoped, tag = 'output window, operand 0']
    #allocation3 [shape = 's32[2]{0}', space=sflag, size = 0x8, scoped, tag = 'scoped memory for squeeze_forward.1']
    %6 = vsyncpa [#allocation3], 0
    %s7 = scalar_lea.sflag [#allocation3], 1
    %8 = vsyncpa %s7, 0
    loop: start=0, step=1, limit=4
    $region2: #{squeeze_forward.1} parent=1 // loop_pre_header
      _
    $region3: #{squeeze_forward.1} parent=1 // loop_header
      %s10 = sphi 0, %s14
      %p11 = scmp.ge.s32.totalorder %s10, 4
      %s17 = sphi 0, %s29
      %s18 = sphi 0, %s25
      %s19 = sphi 0, %s17
      %s20 = sphi 0, %s18
      %s21 = sphi 0, %s19
      %s22 = sphi 0, %s20
      %s34 = sphi 0, %s36
      %s37 = sphi 0, %s34
      %s38 = sphi 0, %s37
      %s54 = sphi 0, %s38
      %s62 = sphi 0, %s64
      %s65 = sphi 0, %s62
      %s66 = sphi 0, %s65
      %s82 = sphi 0, %s66
    $region4: #{squeeze_forward.1} parent=1 // loop_header_branch
      %13 = sbr.rel (%p11) target = $region8
    $region5: #{squeeze_forward.1} parent=1 // loop_body
      %s15 = ssub.s32 %s10, 1
      %s16 = ssub.s32 %s10, 2
      %s23 = sadd.s32 1, %s18
      %p24 = scmp.ge.s32.totalorder %s23, 1
      %s25 = scalar_select %p24, 0, %s23
      %s26 = sadd.s32 1, %s17
      %s27 = scalar_select %p24, %s26, %s17
      %p28 = scmp.ge.s32.totalorder %s27, 2
      %s29 = scalar_select %p28, 0, %s27
      %s30 = ssub.s32 %s17, %s29
      %s31 = ssub.s32 %s18, %s25
      %s32 = sor.u32 %s30, %s31
      %p33 = scmp.eq.s32.totalorder %s32, 0
      %s35 = sadd.s32 %s34, 1
      %s36 = scalar_select %p33, %s34, %s35
      %p39 = pneg %p33
      %p40 = scmp.eq.s32.totalorder %s10, 1
      %p41 = por %p39, %p40
      %p42 = scmp.ne.s32.totalorder %s34, %s37
      %p43 = scmp.eq.s32.totalorder %s10, 0
      %p44 = por %p42, %p43
      %p45 = scmp.ne.s32.totalorder %s34, %s37
      %p46 = scmp.eq.s32.totalorder %s15, 1
      %p47 = por %p45, %p46
      %p48 = scmp.ne.s32.totalorder %s37, %s38
      %p49 = scmp.eq.s32.totalorder %s15, 0
      %p50 = por %p48, %p49
      %p51 = scmp.ne.s32.totalorder %s37, %s38
      %p52 = scmp.eq.s32.totalorder %s16, 1
      %p53 = por %p51, %p52
      %p55 = scmp.ne.s32.totalorder %s38, %s54
      %p56 = scmp.eq.s32.totalorder %s16, 0
      %p57 = por %p55, %p56
      %s58 = ssub.s32 %s17, %s29
      %s59 = ssub.s32 %s18, %s25
      %s60 = sor.u32 %s58, %s59
      %p61 = scmp.eq.s32.totalorder %s60, 0
      %s63 = sadd.s32 %s62, 1
      %s64 = scalar_select %p61, %s62, %s63
      %p67 = pneg %p61
      %p68 = scmp.eq.s32.totalorder %s10, 1
      %p69 = por %p67, %p68
      %p70 = scmp.ne.s32.totalorder %s62, %s65
      %p71 = scmp.eq.s32.totalorder %s10, 0
      %p72 = por %p70, %p71
      %p73 = scmp.ne.s32.totalorder %s62, %s65
      %p74 = scmp.eq.s32.totalorder %s15, 1
      %p75 = por %p73, %p74
      %p76 = scmp.ne.s32.totalorder %s65, %s66
      %p77 = scmp.eq.s32.totalorder %s15, 0
      %p78 = por %p76, %p77
      %p79 = scmp.ne.s32.totalorder %s65, %s66
      %p80 = scmp.eq.s32.totalorder %s16, 1
      %p81 = por %p79, %p80
      %p83 = scmp.ne.s32.totalorder %s66, %s82
      %p84 = scmp.eq.s32.totalorder %s16, 0
      %p85 = por %p83, %p84
      %p86 = scmp.le.s32.totalorder 1, %s10
      %p87 = scmp.lt.s32.totalorder %s10, 3
      %p88 = pnand %p86, %p87
      %p89 = pneg %p88
      // Predicated region
      $region9: #{squeeze_forward.1} parent=5 // pred_check
        _
      $region10: #{squeeze_forward.1} parent=5 // pred_check_branch
        %91 = sbr.rel (%p88) target = $region12
      $region11: #{squeeze_forward.1} parent=5 // pred_region
        %s92 = ssub.s32 %s10, 1
      $region12: #{squeeze_forward.1} parent=5 // pred_fallthru
        _
      %p93 = scmp.lt.s32.totalorder %s10, 2
      // Predicated region
      $region13: #{squeeze_forward.1} parent=5 // pred_check
        %p94 = pneg %p93
      $region14: #{squeeze_forward.1} parent=5 // pred_check_branch
        %96 = sbr.rel (%p94) target = $region16
      $region15: #{squeeze_forward.1} parent=5 // pred_region
        // Predicated region
        $region17: #{squeeze_forward.1} parent=15 // pred_check
          %p97 = pneg %p44
        $region18: #{squeeze_forward.1} parent=15 // pred_check_branch
          %99 = sbr.rel (%p97) target = $region20
        $region19: #{squeeze_forward.1} parent=15 // pred_region
          %s100 = smul.u32 8, %s18
          %p101 = scmp.lt.s32.totalorder %s17, 1
          %s102 = scalar_select %p101, %s17, 1
          %p103 = scmp.lt.s32.totalorder %s100, 7
          %s104 = scalar_select %p103, %s100, 7
          %s105 = smul.addr %s104, 2
          %s106 = smul.addr %s102, 16
          %s107 = sadd.s32 %s105, %s106
          %s108 = smul.addr %s107, 8
          %s109 = scalar_lea.vmem %s0, %s108
          %s110 = smul.u32 8, %s18
        $region20: #{squeeze_forward.1} parent=15 // pred_fallthru
          _
      $region16: #{squeeze_forward.1} parent=5 // pred_fallthru
        _
      %p111 = scmp.le.s32.totalorder 1, %s10
      %p112 = scmp.lt.s32.totalorder %s10, 3
      %p113 = pnand %p111, %p112
      %p114 = pneg %p113
      // Predicated region
      $region21: #{squeeze_forward.1} parent=5 // pred_check
        _
      $region22: #{squeeze_forward.1} parent=5 // pred_check_branch
        %116 = sbr.rel (%p113) target = $region24
      $region23: #{squeeze_forward.1} parent=5 // pred_region
        %s117 = ssub.s32 %s10, 1
        %s118 = smul.u32 8, %s20
        %p119 = scmp.lt.s32.totalorder %s19, 1
        %s120 = scalar_select %p119, %s19, 1
        %p121 = scmp.lt.s32.totalorder %s118, 7
        %s122 = scalar_select %p121, %s118, 7
        %s123 = smul.addr %s122, 2
        %s124 = smul.addr %s120, 16
        %s125 = sadd.s32 %s123, %s124
        %s126 = smul.addr %s125, 8
        %s127 = scalar_lea.vmem %s0, %s126
        %p128 = pneg %p50
        %p129 = pneg %p47
        %p130 = pneg %p78
        %p131 = pneg %p75
        %s132 = sand.u32 %s65, 1
        %s133 = scalar_lea.sflag [#allocation3], %s132
        %s134 = sand.u32 %s65, 1
        %s135 = smul.addr %s134, 64
        %s136 = scalar_lea.vmem [#allocation2], %s135
        %s137 = smul.u32 8, %s20
        %p138 = scmp.lt.s32.totalorder %s19, 1
        %s139 = scalar_select %p138, %s19, 1
        %p140 = scmp.lt.s32.totalorder %s137, 7
        %s141 = scalar_select %p140, %s137, 7
        %s142 = smul.addr %s141, 2
        %s143 = smul.addr %s139, 16
        %s144 = sadd.s32 %s142, %s143
        %s145 = smul.addr %s144, 8
        %s146 = scalar_lea.vmem %s0, %s145
        %s147 = smul.u32 8, %s20
        %s148 = smul.u32 8, %s20
        %v149 = vld [vmem:[%s146] sm:$0xff]
        %v150 = vld [vmem:[%s146 + $0x10] sm:$0xff]
        %v151 = vld [vmem:[%s146 + $0x20] sm:$0xff]
        %v152 = vld [vmem:[%s146 + $0x30] sm:$0xff]
        %v153 = vld [vmem:[%s146 + $0x40] sm:$0xff]
        %v154 = vld [vmem:[%s146 + $0x50] sm:$0xff]
        %v155 = vld [vmem:[%s146 + $0x60] sm:$0xff]
        %v156 = vld [vmem:[%s146 + $0x70] sm:$0xff]
        %s157 = scalar_lea.vmem %s146, 8
        %v158 = vld [vmem:[%s157] sm:$0xff]
        %v159 = vld [vmem:[%s157 + $0x10] sm:$0xff]
        %v160 = vld [vmem:[%s157 + $0x20] sm:$0xff]
        %v161 = vld [vmem:[%s157 + $0x30] sm:$0xff]
        %v162 = vld [vmem:[%s157 + $0x40] sm:$0xff]
        %v163 = vld [vmem:[%s157 + $0x50] sm:$0xff]
        %v164 = vld [vmem:[%s157 + $0x60] sm:$0xff]
        %v165 = vld [vmem:[%s157 + $0x70] sm:$0xff]
        %174 = vrot.lane.b32.xlu0 %v158, 8
        %v175 = vpop.permute.xlu0 %174
        %176 = vrot.lane.b32.xlu0 %v159, 8
        %v177 = vpop.permute.xlu0 %176
        %178 = vrot.lane.b32.xlu0 %v160, 8
        %v179 = vpop.permute.xlu0 %178
        %180 = vrot.lane.b32.xlu0 %v161, 8
        %v181 = vpop.permute.xlu0 %180
        %182 = vrot.lane.b32.xlu0 %v162, 8
        %v183 = vpop.permute.xlu0 %182
        %184 = vrot.lane.b32.xlu0 %v163, 8
        %v185 = vpop.permute.xlu0 %184
        %186 = vrot.lane.b32.xlu0 %v164, 8
        %v187 = vpop.permute.xlu0 %186
        %188 = vrot.lane.b32.xlu0 %v165, 8
        %v189 = vpop.permute.xlu0 %188
        %vm198 = vcmask 64512
        %v199 = vsel %vm198, %v149, %v175
        %v200 = vsel %vm198, %v150, %v177
        %v201 = vsel %vm198, %v151, %v179
        %v202 = vsel %vm198, %v152, %v181
        %v203 = vsel %vm198, %v153, %v183
        %v204 = vsel %vm198, %v154, %v185
        %v205 = vsel %vm198, %v155, %v187
        %v206 = vsel %vm198, %v156, %v189
        %vm207 = vcmask 130048
        %208 = vst.msk [vmem:[%s136] sm:$0xff] %vm207, %v199
        %209 = vst.msk [vmem:[%s136 + $0x8] sm:$0xff] %vm207, %v200
        %210 = vst.msk [vmem:[%s136 + $0x10] sm:$0xff] %vm207, %v201
        %211 = vst.msk [vmem:[%s136 + $0x18] sm:$0xff] %vm207, %v202
        %212 = vst.msk [vmem:[%s136 + $0x20] sm:$0xff] %vm207, %v203
        %213 = vst.msk [vmem:[%s136 + $0x28] sm:$0xff] %vm207, %v204
        %214 = vst.msk [vmem:[%s136 + $0x30] sm:$0xff] %vm207, %v205
        %215 = vst.msk [vmem:[%s136 + $0x38] sm:$0xff] %vm207, %v206
        %s216 = sand.u32 %s65, 1
        %s217 = scalar_lea.sflag [#allocation3], %s216
        %s218 = sand.u32 %s65, 1
        %s219 = smul.addr %s218, 64
        %s220 = scalar_lea.vmem [#allocation2], %s219
        // Predicated region
        $region25: #{squeeze_forward.1} parent=23 // pred_check
          %p221 = pneg %p75
        $region26: #{squeeze_forward.1} parent=23 // pred_check_branch
          %223 = sbr.rel (%p221) target = $region28
        $region27: #{squeeze_forward.1} parent=23 // pred_region
          %s224 = smul.u32 8, %s20
          %s226 = ssub.s32 1024, 1024
          %227 = vsyncadd %s217, %s226
          %s228 = smul.addr %s19, 8
          %s229 = sadd.s32 %s224, %s228
          %s230 = smul.addr %s229, 128
          %s231 = scalar_lea.hbm %s1, %s230
          %s232 = sshll.u32 %s220, 4
          %s233 = int_to_ptr.vmem [resolvable:$true] %s232
          %238 = dma.vmem_to_hbm [thread:$0]  %s233, 1024, %s231, %s217, 128, 128, 8
        $region28: #{squeeze_forward.1} parent=23 // pred_fallthru
          _
      $region24: #{squeeze_forward.1} parent=5 // pred_fallthru
        _
      %p239 = scmp.le.s32.totalorder 2, %s10
      // Predicated region
      $region29: #{squeeze_forward.1} parent=5 // pred_check
        %p240 = pneg %p239
      $region30: #{squeeze_forward.1} parent=5 // pred_check_branch
        %242 = sbr.rel (%p240) target = $region32
      $region31: #{squeeze_forward.1} parent=5 // pred_region
        %s243 = ssub.s32 %s10, 2
        // Predicated region
        $region33: #{squeeze_forward.1} parent=31 // pred_check
          %p244 = pneg %p81
        $region34: #{squeeze_forward.1} parent=31 // pred_check_branch
          %246 = sbr.rel (%p244) target = $region36
        $region35: #{squeeze_forward.1} parent=31 // pred_region
          %s247 = sand.u32 %s66, 1
          %s248 = scalar_lea.sflag [#allocation3], %s247
          %s249 = sand.u32 %s66, 1
          %s250 = smul.addr %s249, 64
          %s251 = scalar_lea.vmem [#allocation2], %s250
          %252 = dma.done %s248, 1024
        $region36: #{squeeze_forward.1} parent=31 // pred_fallthru
          _
      $region32: #{squeeze_forward.1} parent=5 // pred_fallthru
        _
    $region6: #{squeeze_forward.1} parent=1 // loop_footer
      %s14 = sadd.s32 1, %s10
    $region7: #{squeeze_forward.1} parent=1 // loop_footer_branch
      %9 = sbr.rel target = $region3
    $region8: #{squeeze_forward.1} parent=1 // loop_exit
      _
    %253 = vsyncpa [#allocation3], 1
    %s254 = scalar_lea.sflag [#allocation3], 1
    %255 = vsyncpa %s254, 1

</llo_original>
